<compile_context>
chip_gen: v6e
topology: v6e:2x2x1
jax: 0.10.0
libtpu: 0.0.40
codegen_flags: <defaults>
</compile_context>

<pallas_src>
import jax
import jax.numpy as jnp
from jax.experimental import pallas as pl
from jax.experimental.pallas import tpu as pltpu


def _copy_kernel(x_ref, o_ref):
    # Pure lane-dense copy of one (tr, L) tile.
    o_ref[...] = x_ref[...]


def _sublane_multiple(dtype):
    # Sub-32-bit dtypes pack along sublanes: keep tiles a multiple of the
    # packing factor so vregs stay full.
    itemsize = jnp.dtype(dtype).itemsize
    if itemsize >= 4:
        return 8
    if itemsize == 2:
        return 16
    return 32


def _pick_lane_width(padded_total, m):
    # Largest lane width L (multiple of 128) such that R = padded_total / L is
    # an integer multiple of the sublane packing m.  L = 128 always works
    # because padded_total is a multiple of m * 128.
    for lane in (2048, 1024, 512, 256, 128):
        if padded_total % (lane * m) == 0:
            return lane
    return 128


def flatten(x):
    """Pallas equivalent of torch `x.view(x.size(0), -1)` for any input."""
    b = x.shape[0]
    flat = 1
    for d in x.shape[1:]:
        flat *= d
    total = b * flat

    dtype = x.dtype
    itemsize = jnp.dtype(dtype).itemsize
    m = _sublane_multiple(dtype)

    # Pad the 1-D view up to a multiple of (m * 128) so the slab always tiles
    # into full 8x128-aligned vregs (no masked partial stores, no oversized
    # single-block fallback).
    unit = m * 128
    padded_total = ((total + unit - 1) // unit) * unit

    x1d = x.reshape(total)
    if padded_total != total:
        x1d = jnp.pad(x1d, (0, padded_total - total))

    # Batch-independent dense slab (R, L): lane-dense, sublane-dense.
    L = _pick_lane_width(padded_total, m)
    R = padded_total // L
    x2 = x1d.reshape(R, L)

    # ~2 MiB per block -> 2 arrays x 2 pipeline buffers x 2 MiB = 8 MiB total,
    # safe under every generation's default scoped VMEM limit and on the
    # measured streamed-copy roofline plateau.
    target_block_bytes = 2 << 20
    tr = (target_block_bytes // (L * itemsize)) // m * m
    tr = max(m, min(tr, R))

    grid = (pl.cdiv(R, tr),)

    y2 = pl.pallas_call(
        _copy_kernel,
        out_shape=jax.ShapeDtypeStruct((R, L), dtype),
        grid=grid,
        in_specs=[pl.BlockSpec((tr, L), lambda i: (i, 0))],
        out_specs=pl.BlockSpec((tr, L), lambda i: (i, 0)),
        compiler_params=pltpu.CompilerParams(
            # Independent row tiles -> pipeline DMAs and shard across
            # TensorCores on v7x.
            dimension_semantics=("parallel",),
        ),
        cost_estimate=pl.CostEstimate(
            flops=0,
            transcendentals=0,
            bytes_accessed=2 * padded_total * itemsize,
        ),
    )(x2)

    y1d = y2.reshape(padded_total)
    if padded_total != total:
        y1d = y1d[:total]
    return y1d.reshape(b, flat)


if __name__ == "__main__":
    key = jax.random.PRNGKey(0)
    # Module has no parameters; deterministic NCHW input.
    x = jax.random.normal(key, (2, 4, 16, 16), dtype=jnp.float32)

    y = flatten(x)
    jax.block_until_ready(y)

    # Correctness check against plain-JAX reshape (== torch .view semantics).
    y_ref = x.reshape(x.shape[0], -1)
    assert y.shape == (2, 4 * 16 * 16), y.shape
    assert jnp.array_equal(y, y_ref), "flatten kernel mismatch"

    print("KERNEL_OK")
</pallas_src>

<mosaic_0001>
module attributes {stable_mosaic.version = 11 : i64} {
  func.func @_copy_kernel(%arg0: i32, %arg1: memref<8x256xf32, #tpu.memory_space<vmem>>, %arg2: memref<8x256xf32, #tpu.memory_space<vmem>>) attributes {dimension_semantics = [#tpu.dimension_semantics<parallel>], iteration_bounds = array<i64: 1>, scalar_prefetch = 0 : i64, scratch_operands = 0 : i64, tpu.core_type = #tpu.core_type<tc>, window_params = [{transform_indices = @transform_0, window_bounds = array<i64: 8, 256>}, {transform_indices = @transform_1, window_bounds = array<i64: 8, 256>}]} {
    %c0 = arith.constant 0 : index
    %c0_0 = arith.constant 0 : index
    %0 = vector.load %arg1[%c0, %c0_0] : memref<8x256xf32, #tpu.memory_space<vmem>>, vector<8x256xf32>
    %c0_1 = arith.constant 0 : index
    %c0_2 = arith.constant 0 : index
    %1 = vector.load %arg2[%c0_1, %c0_2] : memref<8x256xf32, #tpu.memory_space<vmem>>, vector<8x256xf32>
    tpu.vector_store %arg2[%c0_1, %c0_2], %0 {strides = array<i32>} : memref<8x256xf32, #tpu.memory_space<vmem>>, vector<8x256xf32>,
    return
  }
  func.func @transform_0(%arg0: i32) -> (i32, i32) {
    %c0_i32 = arith.constant 0 : i32
    %c0_i32_0 = arith.constant 0 : i32
    return %arg0, %c0_i32 : i32, i32
  }
  func.func @transform_1(%arg0: i32) -> (i32, i32) {
    %c0_i32 = arith.constant 0 : i32
    %c0_i32_0 = arith.constant 0 : i32
    return %arg0, %c0_i32 : i32, i32
  }
}

</mosaic_0001>

<llo_original>
// kernel: tpu_custom_call.1
$region0: #{tpu_custom_call.1}
  #allocation0 [shape = 'u32[]', space=smem, size = 0x4, offset = 0x4, fixed_abs, tag = 'smem constant byte address 0x4 - core index']
  #allocation1 [shape = 'u32[144,128]{1,0:T(1,128)}', space=vmem, size = 0x12000, scoped, tag = 'internal scratch']
  %s0 = inlined_call_operand.hbm [shape: f32[8,256], index: 0, kind: input, shape index: {}]
  %s1 = inlined_call_operand.hbm [shape: f32[8,256], index: 1, kind: output, shape index: {}]
  %s2 = sld [smem:[#allocation0]]
  $region18: #{tpu_custom_call.1} parent=0
    _
  %s4 = ssub.s32 1, %s2
  %s5 = scalar_select 0, %s4, %s2
  $region1: #{tpu_custom_call.1} parent=0
    #allocation2 [shape = 'u8[8192]{0}', space=vmem, size = 0x2000, scoped, tag = 'input window, operand 0, single buffered']
    #allocation3 [shape = 's32[1]{0}', space=sflag, size = 0x4, scoped, tag = 'scoped memory for tpu_custom_call.1']
    #allocation4 [shape = 's32[1]{0}', space=sflag, size = 0x4, scoped, tag = 'scoped memory for tpu_custom_call.1']
    #allocation5 [shape = 'u8[8192]{0}', space=vmem, size = 0x2000, scoped, tag = 'output window, operand 0, single buffered']
    %6 = vsyncpa [#allocation3], 0
    %7 = vsyncpa [#allocation4], 0
    // Predicated region
    $region2: #{tpu_custom_call.1} parent=1 // pred_check
      _
    $region3: #{tpu_custom_call.1} parent=1 // pred_check_branch
      %9 = sbr.rel (0) target = $region5
    $region4: #{tpu_custom_call.1} parent=1 // pred_region
      %s11 = ssub.s32 256, 256
      %12 = vsyncadd [#allocation3], %s11
      %s14 = sshll.u32 [#allocation2], 4
      %s15 = int_to_ptr.vmem [resolvable:$true] %s14
      %17 = dma.hbm_to_vmem [thread:$0]  %s0, 256, %s15, [#allocation3]
    $region5: #{tpu_custom_call.1} parent=1 // pred_fallthru
      _
    // Predicated region
    $region6: #{tpu_custom_call.1} parent=1 // pred_check
      _
    $region7: #{tpu_custom_call.1} parent=1 // pred_check_branch
      %19 = sbr.rel (0) target = $region9
    $region8: #{tpu_custom_call.1} parent=1 // pred_region
      %20 = dma.done [#allocation3], 256
    $region9: #{tpu_custom_call.1} parent=1 // pred_fallthru
      _
    %v21 = vld [vmem:[#allocation2] sm:$0xff]
    %v22 = vld [vmem:[#allocation2 + $0x8] sm:$0xff]
    %23 = vst [vmem:[#allocation5] sm:$0xff] %v21
    %24 = vst [vmem:[#allocation5 + $0x8] sm:$0xff] %v22
    // Predicated region
    $region10: #{tpu_custom_call.1} parent=1 // pred_check
      _
    $region11: #{tpu_custom_call.1} parent=1 // pred_check_branch
      %26 = sbr.rel (0) target = $region13
    $region12: #{tpu_custom_call.1} parent=1 // pred_region
      %s28 = ssub.s32 256, 256
      %29 = vsyncadd [#allocation4], %s28
      %s31 = sshll.u32 [#allocation5], 4
      %s32 = int_to_ptr.vmem [resolvable:$true] %s31
      %34 = dma.vmem_to_hbm [thread:$0]  %s32, 256, %s1, [#allocation4]
    $region13: #{tpu_custom_call.1} parent=1 // pred_fallthru
      _
    // Predicated region
    $region14: #{tpu_custom_call.1} parent=1 // pred_check
      _
    $region15: #{tpu_custom_call.1} parent=1 // pred_check_branch
      %36 = sbr.rel (0) target = $region17
    $region16: #{tpu_custom_call.1} parent=1 // pred_region
      %37 = dma.done [#allocation4], 256
    $region17: #{tpu_custom_call.1} parent=1 // pred_fallthru
      _
    %38 = vsyncpa [#allocation3], 1
    %39 = vsyncpa [#allocation4], 1

</llo_original>
